<compile_context>
chip_gen: v7x
topology: tpu7x:2x2x1
jax: 0.10.0
libtpu: 0.0.40
codegen_flags: <defaults>
</compile_context>

<pallas_src>
import functools

import jax
import jax.numpy as jnp
from jax import lax
from jax.experimental import pallas as pl
from jax.experimental.pallas import tpu as pltpu


def _self_attention_kernel(x_ref, wqkv_ref, bqkv_ref, o_ref, *,
                           d_pad, s_valid, compute_dtype):
    bt, s, d_in = x_ref.shape

    # Fused Q/K/V projection: one MXU matmul over all Bt*S rows (f32).
    x2 = x_ref[...].reshape(bt * s, d_in)                        # (Bt*S, D_in)
    qkv = jnp.dot(x2, wqkv_ref[...],
                  preferred_element_type=jnp.float32) + bqkv_ref[...]

    # Static, 128-aligned column slices (1/sqrt(D_in) already folded into q).
    q = qkv[:, 0 * d_pad:1 * d_pad].reshape(bt, s, d_pad)
    k = qkv[:, 1 * d_pad:2 * d_pad].reshape(bt, s, d_pad)
    v = qkv[:, 2 * d_pad:3 * d_pad].reshape(bt, s, d_pad)

    # scores[b,q,k] = sum_d q[b,q,d] * k[b,k,d] -- transpose-free MXU matmul.
    # bf16 inputs (fast MXU path), f32 accumulation.
    scores = jnp.einsum("bqd,bkd->bqk",
                        q.astype(compute_dtype), k.astype(compute_dtype),
                        preferred_element_type=jnp.float32)

    # Mask padded key columns (only generated when the wrapper padded S).
    if s_valid < s:
        col = lax.broadcasted_iota(jnp.int32, (s, s), 1)
        scores = jnp.where(col < s_valid, scores, -1e30)

    # Numerically-stable softmax over the key axis; normalization deferred.
    m = jnp.max(scores, axis=-1, keepdims=True)
    e = jnp.exp(scores - m)
    denom = jnp.sum(e, axis=-1, keepdims=True)

    # Un-normalized PV matmul, then normalize the O(Bt*S*Dp) result
    # (cheaper than normalizing the O(Bt*S*S) probabilities when S > Dp).
    weighted = jnp.einsum("bqk,bkd->bqd",
                          e.astype(compute_dtype), v.astype(compute_dtype),
                          preferred_element_type=jnp.float32)
    o_ref[...] = (weighted * (1.0 / denom)).astype(o_ref.dtype)


def _vmem_capacity_bytes(default=64 << 20):
    """Physical VMEM of the current chip generation; conservative fallback."""
    try:
        info = pltpu.get_tpu_info()
        return int(getattr(info, "vmem_capacity_bytes", default))
    except Exception:
        return default


def _working_set_bytes(bt, s, d_in, dp, compute_itemsize=2):
    """Rough per-grid-step VMEM estimate (blocks, weights, intermediates)."""
    f32 = 4
    rows = bt * s
    io = 2 * rows * d_in * f32 + 2 * rows * dp * f32        # double-buffered x / out
    w = 2 * (d_in * 3 * dp + 3 * dp) * f32                  # fused weights + bias
    row_tmp = rows * 3 * dp * f32                            # qkv
    row_tmp += rows * 3 * dp * compute_itemsize              # q/k/v compute-dtype copies
    row_tmp += rows * dp * f32                               # un-normalized PV output
    score_tmp = bt * s * s * (2 * f32 + compute_itemsize)    # scores, exp, bf16 copy
    return io + w + row_tmp + score_tmp


def _pick_batch_tile(B, S_pad, D_in, Dp, vmem_cap):
    # Rows per grid step: aim for ~1024 (multiple of 256 -> fills v6e/v7x MXU
    # and amortizes ~0.35us/step), bounded by the per-step VMEM working set.
    row_target = 1024
    bt = max(1, min(B, row_target // S_pad)) if S_pad <= row_target else 1
    while bt > 1 and _working_set_bytes(bt, S_pad, D_in, Dp) > 0.6 * vmem_cap:
        bt -= 1
    # Keep grid length >= 2 whenever B >= 2 so both v7x TensorCores get work.
    if B >= 2:
        bt = min(bt, -(-B // 2))   # ceil(B/2)
    # TODO(synk): if even bt=1 blows the budget (very large S), switch to the
    # flash-style KV-tiled path instead of materializing (1, S, S) scores.
    return bt


def self_attention(x, wq, bq, wk, bk, wv, bv, input_dimension,
                   *, compute_dtype=jnp.bfloat16):
    """x: (B, S, D_in); wq/wk/wv: (D_in, D_out); bq/bk/bv: (D_out,)."""
    B, S, D_in = x.shape
    D_out = wq.shape[1]
    scale = 1.0 / (float(input_dimension) ** 0.5)

    LANE, SUB = 128, 8
    Dp = pl.cdiv(D_out, LANE) * LANE          # lane-dense output columns
    Sp = pl.cdiv(S, SUB) * SUB                # sublane-aligned sequence

    if Dp != D_out:
        pad_w = lambda w: jnp.pad(w, ((0, 0), (0, Dp - D_out)))
        pad_b = lambda b: jnp.pad(b, ((0, Dp - D_out),))
    else:
        pad_w = lambda w: w
        pad_b = lambda b: b

    # Fuse Q/K/V into one (D_in, 3*Dp) weight and (1, 3*Dp) bias; fold the
    # 1/sqrt(input_dimension) scale into the query projection.
    wqkv = jnp.concatenate([pad_w(wq) * scale, pad_w(wk), pad_w(wv)], axis=1)
    bqkv = jnp.concatenate(
        [pad_b(bq) * scale, pad_b(bk), pad_b(bv)]).reshape(1, 3 * Dp)

    cap = _vmem_capacity_bytes()
    Bt = _pick_batch_tile(B, Sp, D_in, Dp, cap)
    Bp = pl.cdiv(B, Bt) * Bt                  # pad batch to a multiple of Bt

    x_p = x
    if Sp != S or Bp != B:
        x_p = jnp.pad(x, ((0, Bp - B), (0, Sp - S), (0, 0)))

    grid = (Bp // Bt,)
    kernel = functools.partial(_self_attention_kernel,
                               d_pad=Dp, s_valid=S, compute_dtype=compute_dtype)

    est = _working_set_bytes(Bt, Sp, D_in, Dp)
    vmem_limit = int(min(0.9 * cap, max(2 * est, 32 << 20)))

    out_padded = pl.pallas_call(
        kernel,
        out_shape=jax.ShapeDtypeStruct((Bp, Sp, Dp), x.dtype),
        grid_spec=pltpu.PrefetchScalarGridSpec(
            num_scalar_prefetch=0,
            grid=grid,
            in_specs=[
                pl.BlockSpec((Bt, Sp, D_in), lambda b: (b, 0, 0)),   # x
                pl.BlockSpec((D_in, 3 * Dp), lambda b: (0, 0)),      # fused W
                pl.BlockSpec((1, 3 * Dp), lambda b: (0, 0)),         # fused bias
            ],
            out_specs=pl.BlockSpec((Bt, Sp, Dp), lambda b: (b, 0, 0)),
        ),
        compiler_params=pltpu.CompilerParams(
            dimension_semantics=("parallel",),
            vmem_limit_bytes=vmem_limit),
    )(x_p, wqkv, bqkv)

    # Drop padding only when padding was actually added.
    if Bp != B or Sp != S or Dp != D_out:
        return out_padded[:B, :S, :D_out]
    return out_padded


def self_attention_ref(x, wq, bq, wk, bk, wv, bv, input_dimension):
    # Pure-JAX reference mirroring the PyTorch forward exactly (full f32).
    hi = lax.Precision.HIGHEST
    q = jnp.einsum("bsd,de->bse", x, wq, precision=hi) + bq
    k = jnp.einsum("bsd,de->bse", x, wk, precision=hi) + bk
    v = jnp.einsum("bsd,de->bse", x, wv, precision=hi) + bv
    scores = jnp.einsum("bqd,bkd->bqk", q, k,
                        precision=hi) / (float(input_dimension) ** 0.5)
    attn = jax.nn.softmax(scores, axis=2)
    return jnp.einsum("bqk,bkd->bqd", attn, v, precision=hi)


if __name__ == "__main__":
    B, S = 2, 8
    input_dimension, output_dimension = 16, 32

    key = jax.random.PRNGKey(0)
    kx, kwq, kbq, kwk, kbk, kwv, kbv = jax.random.split(key, 7)

    x = jax.random.normal(kx, (B, S, input_dimension), dtype=jnp.float32)

    # Deterministic parameter init (nn.Linear-style uniform(-1/sqrt(fan_in), ...));
    # stored as (D_in, D_out), i.e. transposed relative to PyTorch's weight.
    bound = 1.0 / (input_dimension ** 0.5)
    init = lambda k, shape: jax.random.uniform(
        k, shape, dtype=jnp.float32, minval=-bound, maxval=bound)
    wq = init(kwq, (input_dimension, output_dimension))
    bq = init(kbq, (output_dimension,))
    wk = init(kwk, (input_dimension, output_dimension))
    bk = init(kbk, (output_dimension,))
    wv = init(kwv, (input_dimension, output_dimension))
    bv = init(kbv, (output_dimension,))

    out = self_attention(x, wq, bq, wk, bk, wv, bv, input_dimension)
    out = jax.block_until_ready(out)

    ref = self_attention_ref(x, wq, bq, wk, bk, wv, bv, input_dimension)
    assert out.shape == (B, S, output_dimension)

    # The attention matmuls deliberately use bf16 MXU inputs (perf review);
    # expected deviation vs the f32 reference is a few 1e-3 at these
    # magnitudes.  2e-2 leaves comfortable margin while still catching any
    # structural bug (which would show as O(0.1+) error).
    max_err = float(jnp.max(jnp.abs(out - ref)))
    assert jnp.allclose(out, ref, atol=2e-2, rtol=2e-2), (
        f"mismatch vs reference (max abs err {max_err:.3e})")

    print("KERNEL_OK")
</pallas_src>

<mosaic_0001>
module attributes {stable_mosaic.version = 11 : i64} {
  func.func @_self_attention_kernel(%arg0: i32, %arg1: memref<1x8x16xf32, #tpu.memory_space<vmem>>, %arg2: memref<16x384xf32, #tpu.memory_space<vmem>>, %arg3: memref<1x384xf32, #tpu.memory_space<vmem>>, %arg4: memref<1x8x128xf32, #tpu.memory_space<vmem>>) attributes {dimension_semantics = [#tpu.dimension_semantics<parallel>], iteration_bounds = array<i64: 2>, scalar_prefetch = 0 : i64, scratch_operands = 0 : i64, tpu.core_type = #tpu.core_type<tc>, window_params = [{transform_indices = @transform_0, window_bounds = array<i64: 1, 8, 16>}, {pipeline_mode = #tpu.pipeline_mode<synchronous>, transform_indices = @transform_1, window_bounds = array<i64: 16, 384>}, {pipeline_mode = #tpu.pipeline_mode<synchronous>, transform_indices = @transform_2, window_bounds = array<i64: 1, 384>}, {transform_indices = @transform_3, window_bounds = array<i64: 1, 8, 128>}]} {
    %c0 = arith.constant 0 : index
    %c0_0 = arith.constant 0 : index
    %c0_1 = arith.constant 0 : index
    %0 = vector.load %arg1[%c0, %c0_0, %c0_1] : memref<1x8x16xf32, #tpu.memory_space<vmem>>, vector<1x8x16xf32>
    %1 = vector.shape_cast %0 : vector<1x8x16xf32> to vector<8x16xf32>
    %c0_2 = arith.constant 0 : index
    %c0_3 = arith.constant 0 : index
    %2 = vector.load %arg2[%c0_2, %c0_3] : memref<16x384xf32, #tpu.memory_space<vmem>>, vector<16x384xf32>
    %cst = arith.constant dense<0.000000e+00> : vector<8x384xf32>
    %3 = tpu.matmul %1, %2, %cst {dimension_numbers = #tpu.dot_dimension_numbers<[1], [0], [0], [1], [0, 0, 1, 1], [], []>} : vector<8x16xf32>, vector<16x384xf32>, vector<8x384xf32> -> vector<8x384xf32>
    %c0_4 = arith.constant 0 : index
    %c0_5 = arith.constant 0 : index
    %4 = vector.load %arg3[%c0_4, %c0_5] : memref<1x384xf32, #tpu.memory_space<vmem>>, vector<1x384xf32>
    %5 = vector.broadcast %4 : vector<1x384xf32> to vector<8x384xf32>
    %6 = arith.addf %3, %5 : vector<8x384xf32>
    %7 = vector.extract_strided_slice %6 {offsets = [0, 0], sizes = [8, 128], strides = [1, 1]} : vector<8x384xf32> to vector<8x128xf32>
    %8 = vector.shape_cast %7 : vector<8x128xf32> to vector<1x8x128xf32>
    %9 = vector.extract_strided_slice %6 {offsets = [0, 128], sizes = [8, 128], strides = [1, 1]} : vector<8x384xf32> to vector<8x128xf32>
    %10 = vector.shape_cast %9 : vector<8x128xf32> to vector<1x8x128xf32>
    %11 = vector.extract_strided_slice %6 {offsets = [0, 256], sizes = [8, 128], strides = [1, 1]} : vector<8x384xf32> to vector<8x128xf32>
    %12 = vector.shape_cast %11 : vector<8x128xf32> to vector<1x8x128xf32>
    %13 = arith.truncf %8 : vector<1x8x128xf32> to vector<1x8x128xbf16>
    %14 = arith.truncf %10 : vector<1x8x128xf32> to vector<1x8x128xbf16>
    "tpu.trace_start"() <{level = 10 : i32, message = "bqd,bkd->bqk"}> : () -> ()
    %cst_6 = arith.constant dense<0.000000e+00> : vector<1x8x8xf32>
    %15 = tpu.matmul %13, %14, %cst_6 {dimension_numbers = #tpu.dot_dimension_numbers<[2], [2], [1], [1], [0, 0, 0, 1, 1, 1], [0], [0]>} : vector<1x8x128xbf16>, vector<1x8x128xbf16>, vector<1x8x8xf32> -> vector<1x8x8xf32>
    "tpu.trace_stop"() : () -> ()
    %cst_7 = arith.constant dense<0xFF800000> : vector<1x8xf32>
    %16 = vector.multi_reduction <maximumf>, %15, %cst_7 [2] : vector<1x8x8xf32> to vector<1x8xf32>
    %17 = vector.shape_cast %16 : vector<1x8xf32> to vector<1x8x1xf32>
    %18 = vector.broadcast %17 : vector<1x8x1xf32> to vector<1x8x8xf32>
    %19 = arith.subf %15, %18 : vector<1x8x8xf32>
    %20 = math.exp %19 : vector<1x8x8xf32>
    %cst_8 = arith.constant dense<0.000000e+00> : vector<1x8xf32>
    %21 = vector.multi_reduction <add>, %20, %cst_8 [2] : vector<1x8x8xf32> to vector<1x8xf32>
    %22 = vector.shape_cast %21 : vector<1x8xf32> to vector<1x8x1xf32>
    %23 = arith.truncf %20 : vector<1x8x8xf32> to vector<1x8x8xbf16>
    %24 = arith.truncf %12 : vector<1x8x128xf32> to vector<1x8x128xbf16>
    "tpu.trace_start"() <{level = 10 : i32, message = "bqk,bkd->bqd"}> : () -> ()
    %cst_9 = arith.constant dense<0.000000e+00> : vector<1x8x128xf32>
    %25 = tpu.matmul %23, %24, %cst_9 {dimension_numbers = #tpu.dot_dimension_numbers<[2], [1], [1], [2], [0, 0, 0, 1, 1, 2], [0], [0]>} : vector<1x8x8xbf16>, vector<1x8x128xbf16>, vector<1x8x128xf32> -> vector<1x8x128xf32>
    "tpu.trace_stop"() : () -> ()
    %cst_10 = arith.constant 1.000000e+00 : f32
    %26 = vector.broadcast %cst_10 : f32 to vector<1x8x1xf32>
    %27 = arith.divf %26, %22 : vector<1x8x1xf32>
    %28 = vector.broadcast %27 : vector<1x8x1xf32> to vector<1x8x128xf32>
    %29 = arith.mulf %25, %28 : vector<1x8x128xf32>
    %c0_11 = arith.constant 0 : index
    %c0_12 = arith.constant 0 : index
    %c0_13 = arith.constant 0 : index
    %30 = vector.load %arg4[%c0_11, %c0_12, %c0_13] : memref<1x8x128xf32, #tpu.memory_space<vmem>>, vector<1x8x128xf32>
    tpu.vector_store %arg4[%c0_11, %c0_12, %c0_13], %29 {strides = array<i32>} : memref<1x8x128xf32, #tpu.memory_space<vmem>>, vector<1x8x128xf32>,
    return
  }
  func.func @transform_0(%arg0: i32) -> (i32, i32, i32) {
    %c0_i32 = arith.constant 0 : i32
    %c0_i32_0 = arith.constant 0 : i32
    %c0_i32_1 = arith.constant 0 : i32
    return %arg0, %c0_i32, %c0_i32_0 : i32, i32, i32
  }
  func.func @transform_1(%arg0: i32) -> (i32, i32) {
    %c0_i32 = arith.constant 0 : i32
    %c0_i32_0 = arith.constant 0 : i32
    %c0_i32_1 = arith.constant 0 : i32
    return %c0_i32, %c0_i32_0 : i32, i32
  }
  func.func @transform_2(%arg0: i32) -> (i32, i32) {
    %c0_i32 = arith.constant 0 : i32
    %c0_i32_0 = arith.constant 0 : i32
    %c0_i32_1 = arith.constant 0 : i32
    return %c0_i32, %c0_i32_0 : i32, i32
  }
  func.func @transform_3(%arg0: i32) -> (i32, i32, i32) {
    %c0_i32 = arith.constant 0 : i32
    %c0_i32_0 = arith.constant 0 : i32
    %c0_i32_1 = arith.constant 0 : i32
    return %arg0, %c0_i32, %c0_i32_0 : i32, i32, i32
  }
}

</mosaic_0001>

<llo_original>
// kernel: tpu_custom_call.1
$region0: #{tpu_custom_call.1}
  #allocation0 [shape = 'u32[]', space=smem, size = 0x4, offset = 0x4, fixed_abs, tag = 'smem constant byte address 0x4 - core index']
  #allocation1 [shape = 'u32[144,128]{1,0:T(1,128)}', space=vmem, size = 0x12000, scoped, tag = 'internal scratch']
  %s0 = inlined_call_operand.hbm [shape: f32[2,8,16], index: 0, kind: input, shape index: {}]
  %s1 = inlined_call_operand.hbm [shape: f32[16,384], index: 1, kind: input, shape index: {}]
  %s2 = inlined_call_operand.vmem [shape: f32[1,384], index: 2, kind: input, shape index: {}]
  %s3 = inlined_call_operand.hbm [shape: f32[2,8,128], index: 3, kind: output, shape index: {}]
  %s4 = sld [smem:[#allocation0]]
  $region53: #{tpu_custom_call.1} parent=0
    _
  %s6 = ssub.s32 1, %s4
  %s7 = scalar_select 0, %s6, %s4
  $region1: #{tpu_custom_call.1} parent=0
    #allocation2 [shape = 'u8[8192]{0}', space=vmem, size = 0x2000, scoped, tag = 'input window, operand 0']
    #allocation3 [shape = 's32[2]{0}', space=sflag, size = 0x8, scoped, tag = 'scoped memory for tpu_custom_call.1']
    #allocation4 [shape = 's32[2]{0}', space=sflag, size = 0x8, scoped, tag = 'scoped memory for tpu_custom_call.1']
    #allocation5 [shape = 'u8[24576]{0}', space=vmem, size = 0x6000, scoped, tag = 'input window, operand 1, single buffered']
    #allocation6 [shape = 's32[1]{0}', space=sflag, size = 0x4, scoped, tag = 'scoped memory for tpu_custom_call.1']
    #allocation7 [shape = 'u8[8192]{0}', space=vmem, size = 0x2000, scoped, tag = 'output window, operand 0']
    %8 = vsyncpa [#allocation3], 0
    %s9 = scalar_lea.sflag [#allocation3], 1
    %10 = vsyncpa %s9, 0
    %11 = vsyncpa [#allocation6], 0
    %12 = vsyncpa [#allocation4], 0
    %s13 = scalar_lea.sflag [#allocation4], 1
    %14 = vsyncpa %s13, 0
    loop: start=0, step=1, limit=4
    $region2: #{tpu_custom_call.1} parent=1 // loop_pre_header
      _
    $region3: #{tpu_custom_call.1} parent=1 // loop_header
      %s16 = sphi 0, %s20
      %p17 = scmp.ge.s32.totalorder %s16, 4
      %s26 = sphi 0, %s28
      %s29 = sphi 0, %s26
      %s30 = sphi 0, %s29
      %s46 = sphi 0, %s30
      %s50 = sphi 0, %s50
      %s52 = sphi 0, %s50
      %s53 = sphi 0, %s52
      %s67 = sphi 0, %s53
      %s71 = sphi 0, %s71
      %s73 = sphi 0, %s71
      %s74 = sphi 0, %s73
      %s88 = sphi 0, %s74
      %s94 = sphi 0, %s96
      %s97 = sphi 0, %s94
      %s98 = sphi 0, %s97
      %s114 = sphi 0, %s98
    $region4: #{tpu_custom_call.1} parent=1 // loop_header_branch
      %19 = sbr.rel (%p17) target = $region8
    $region5: #{tpu_custom_call.1} parent=1 // loop_body
      %s21 = ssub.s32 %s16, 1
      %s22 = ssub.s32 %s16, 2
      %s23 = sadd.s32 %s16, 1
      %s24 = ssub.s32 %s16, %s23
      %p25 = scmp.eq.s32.totalorder %s24, 0
      %s27 = sadd.s32 %s26, 1
      %s28 = scalar_select %p25, %s26, %s27
      %p31 = pneg %p25
      %p32 = scmp.eq.s32.totalorder %s16, 1
      %p33 = por %p31, %p32
      %p34 = scmp.ne.s32.totalorder %s26, %s29
      %p35 = scmp.eq.s32.totalorder %s16, 0
      %p36 = por %p34, %p35
      %p37 = scmp.ne.s32.totalorder %s26, %s29
      %p38 = scmp.eq.s32.totalorder %s21, 1
      %p39 = por %p37, %p38
      %p40 = scmp.ne.s32.totalorder %s29, %s30
      %p41 = scmp.eq.s32.totalorder %s21, 0
      %p42 = por %p40, %p41
      %p43 = scmp.ne.s32.totalorder %s29, %s30
      %p44 = scmp.eq.s32.totalorder %s22, 1
      %p45 = por %p43, %p44
      %p47 = scmp.ne.s32.totalorder %s30, %s46
      %p48 = scmp.eq.s32.totalorder %s22, 0
      %p49 = por %p47, %p48
      %s51 = sadd.s32 %s50, 1
      %p54 = scmp.eq.s32.totalorder %s16, 1
      %p55 = scmp.ne.s32.totalorder %s50, %s52
      %p56 = scmp.eq.s32.totalorder %s16, 0
      %p57 = por %p55, %p56
      %p58 = scmp.ne.s32.totalorder %s50, %s52
      %p59 = scmp.eq.s32.totalorder %s21, 1
      %p60 = por %p58, %p59
      %p61 = scmp.ne.s32.totalorder %s52, %s53
      %p62 = scmp.eq.s32.totalorder %s21, 0
      %p63 = por %p61, %p62
      %p64 = scmp.ne.s32.totalorder %s52, %s53
      %p65 = scmp.eq.s32.totalorder %s22, 1
      %p66 = por %p64, %p65
      %p68 = scmp.ne.s32.totalorder %s53, %s67
      %p69 = scmp.eq.s32.totalorder %s22, 0
      %p70 = por %p68, %p69
      %s72 = sadd.s32 %s71, 1
      %p75 = scmp.eq.s32.totalorder %s16, 1
      %p76 = scmp.ne.s32.totalorder %s71, %s73
      %p77 = scmp.eq.s32.totalorder %s16, 0
      %p78 = por %p76, %p77
      %p79 = scmp.ne.s32.totalorder %s71, %s73
      %p80 = scmp.eq.s32.totalorder %s21, 1
      %p81 = por %p79, %p80
      %p82 = scmp.ne.s32.totalorder %s73, %s74
      %p83 = scmp.eq.s32.totalorder %s21, 0
      %p84 = por %p82, %p83
      %p85 = scmp.ne.s32.totalorder %s73, %s74
      %p86 = scmp.eq.s32.totalorder %s22, 1
      %p87 = por %p85, %p86
      %p89 = scmp.ne.s32.totalorder %s74, %s88
      %p90 = scmp.eq.s32.totalorder %s22, 0
      %p91 = por %p89, %p90
      %s92 = ssub.s32 %s16, %s23
      %p93 = scmp.eq.s32.totalorder %s92, 0
      %s95 = sadd.s32 %s94, 1
      %s96 = scalar_select %p93, %s94, %s95
      %p99 = pneg %p93
      %p100 = scmp.eq.s32.totalorder %s16, 1
      %p101 = por %p99, %p100
      %p102 = scmp.ne.s32.totalorder %s94, %s97
      %p103 = scmp.eq.s32.totalorder %s16, 0
      %p104 = por %p102, %p103
      %p105 = scmp.ne.s32.totalorder %s94, %s97
      %p106 = scmp.eq.s32.totalorder %s21, 1
      %p107 = por %p105, %p106
      %p108 = scmp.ne.s32.totalorder %s97, %s98
      %p109 = scmp.eq.s32.totalorder %s21, 0
      %p110 = por %p108, %p109
      %p111 = scmp.ne.s32.totalorder %s97, %s98
      %p112 = scmp.eq.s32.totalorder %s22, 1
      %p113 = por %p111, %p112
      %p115 = scmp.ne.s32.totalorder %s98, %s114
      %p116 = scmp.eq.s32.totalorder %s22, 0
      %p117 = por %p115, %p116
      %p118 = scmp.le.s32.totalorder 1, %s16
      %p119 = scmp.lt.s32.totalorder %s16, 3
      %p120 = pnand %p118, %p119
      %p121 = pneg %p120
      // Predicated region
      $region9: #{tpu_custom_call.1} parent=5 // pred_check
        _
      $region10: #{tpu_custom_call.1} parent=5 // pred_check_branch
        %123 = sbr.rel (%p120) target = $region12
      $region11: #{tpu_custom_call.1} parent=5 // pred_region
        %s124 = ssub.s32 %s16, 1
        // Predicated region
        $region13: #{tpu_custom_call.1} parent=11 // pred_check
          %p125 = pneg %p63
        $region14: #{tpu_custom_call.1} parent=11 // pred_check_branch
          %127 = sbr.rel (%p125) target = $region16
        $region15: #{tpu_custom_call.1} parent=11 // pred_region
          %s129 = ssub.s32 768, 768
          %130 = vsyncadd [#allocation6], %s129
          %s131 = sshll.u32 [#allocation5], 4
          %s132 = int_to_ptr.vmem [resolvable:$true] %s131
          %137 = dma.hbm_to_vmem [thread:$0]  %s1, 768, %s132, [#allocation6], 384, 384, 24
        $region16: #{tpu_custom_call.1} parent=11 // pred_fallthru
          _
        // Predicated region
        $region17: #{tpu_custom_call.1} parent=11 // pred_check
          %p138 = pneg %p84
        $region18: #{tpu_custom_call.1} parent=11 // pred_check_branch
          %140 = sbr.rel (%p138) target = $region20
        $region19: #{tpu_custom_call.1} parent=11 // pred_region
          _
        $region20: #{tpu_custom_call.1} parent=11 // pred_fallthru
          _
      $region12: #{tpu_custom_call.1} parent=5 // pred_fallthru
        _
      %p141 = scmp.lt.s32.totalorder %s16, 2
      // Predicated region
      $region21: #{tpu_custom_call.1} parent=5 // pred_check
        %p142 = pneg %p141
      $region22: #{tpu_custom_call.1} parent=5 // pred_check_branch
        %144 = sbr.rel (%p142) target = $region24
      $region23: #{tpu_custom_call.1} parent=5 // pred_region
        // Predicated region
        $region25: #{tpu_custom_call.1} parent=23 // pred_check
          %p145 = pneg %p36
        $region26: #{tpu_custom_call.1} parent=23 // pred_check_branch
          %147 = sbr.rel (%p145) target = $region28
        $region27: #{tpu_custom_call.1} parent=23 // pred_region
          %s148 = sand.u32 %s26, 1
          %s149 = scalar_lea.sflag [#allocation3], %s148
          %s150 = sand.u32 %s26, 1
          %s151 = smul.addr %s150, 8
          %s152 = scalar_lea.vmem [#allocation2], %s151
          %s154 = ssub.s32 128, 128
          %155 = vsyncadd %s149, %s154
          %s156 = smul.addr %s16, 128
          %s157 = scalar_lea.hbm %s0, %s156
          %s159 = sshll.u32 %s152, 4
          %s160 = int_to_ptr.vmem [resolvable:$true] %s159
          %162 = dma.hbm_to_vmem [thread:$0]  %s157, 128, %s160, %s149
        $region28: #{tpu_custom_call.1} parent=23 // pred_fallthru
          _
      $region24: #{tpu_custom_call.1} parent=5 // pred_fallthru
        _
      %p163 = scmp.le.s32.totalorder 1, %s16
      %p164 = scmp.lt.s32.totalorder %s16, 3
      %p165 = pnand %p163, %p164
      %p166 = pneg %p165
      // Predicated region
      $region29: #{tpu_custom_call.1} parent=5 // pred_check
        _
      $region30: #{tpu_custom_call.1} parent=5 // pred_check_branch
        %168 = sbr.rel (%p165) target = $region32
      $region31: #{tpu_custom_call.1} parent=5 // pred_region
        %s169 = ssub.s32 %s16, 1
        %s170 = sand.u32 %s29, 1
        %s171 = scalar_lea.sflag [#allocation3], %s170
        %s172 = sand.u32 %s29, 1
        %s173 = smul.addr %s172, 8
        %s174 = scalar_lea.vmem [#allocation2], %s173
        // Predicated region
        $region33: #{tpu_custom_call.1} parent=31 // pred_check
          %p175 = pneg %p42
        $region34: #{tpu_custom_call.1} parent=31 // pred_check_branch
          %177 = sbr.rel (%p175) target = $region36
        $region35: #{tpu_custom_call.1} parent=31 // pred_region
          %178 = dma.done %s171, 128
        $region36: #{tpu_custom_call.1} parent=31 // pred_fallthru
          _
        // Predicated region
        $region37: #{tpu_custom_call.1} parent=31 // pred_check
          %p179 = pneg %p63
        $region38: #{tpu_custom_call.1} parent=31 // pred_check_branch
          %181 = sbr.rel (%p179) target = $region40
        $region39: #{tpu_custom_call.1} parent=31 // pred_region
          %182 = dma.done [#allocation6], 768
        $region40: #{tpu_custom_call.1} parent=31 // pred_fallthru
          _
        %s183 = sand.u32 %s29, 1
        %s184 = scalar_lea.sflag [#allocation3], %s183
        %s185 = sand.u32 %s29, 1
        %s186 = smul.addr %s185, 8
        %s187 = scalar_lea.vmem [#allocation2], %s186
        %p188 = pneg %p42
        %p189 = pneg %p39
        %p190 = pneg %p63
        %p191 = pneg %p60
        %p192 = pneg %p84
        %p193 = pneg %p81
        %p194 = pneg %p110
        %p195 = pneg %p107
        %s196 = sand.u32 %s97, 1
        %s197 = scalar_lea.sflag [#allocation4], %s196
        %s198 = sand.u32 %s97, 1
        %s199 = smul.addr %s198, 8
        %s200 = scalar_lea.vmem [#allocation7], %s199
        %v202 = vld [vmem:[%s174] sm:$0xff]
        %v203 = vld [vmem:[#allocation5] sm:$0xff]
        %v204 = vld [vmem:[#allocation5 + $0x8] sm:$0xff]
        %v205 = vld [vmem:[#allocation5 + $0x10] sm:$0xff]
        %v206 = vld [vmem:[#allocation5 + $0x18] sm:$0xff]
        %v207 = vld [vmem:[#allocation5 + $0x20] sm:$0xff]
        %v208 = vld [vmem:[#allocation5 + $0x28] sm:$0xff]
        %v209 = vld [vmem:[%s2] sm:$0x7]
        %v211 = vlaneseq
        %v212 = vshrl.u32 %v211, 7
        %v213 = vsub.s32 0, %v212
        %v214 = vrot.slane %v209, %v213
        %v215 = vlaneseq
        %v216 = vshrl.u32 %v215, 7
        %v217 = vsub.s32 1, %v216
        %v218 = vrot.slane %v209, %v217
        %v219 = vlaneseq
        %v220 = vshrl.u32 %v219, 7
        %v221 = vsub.s32 2, %v220
        %v222 = vrot.slane %v209, %v221
        %vm226 = vcmask 130048
        %v228 = vsel %vm226, %v202, 0
        %230 = vmatprep.subr.mxu0 %v204
        %231 = vmatpush1.msra.mxu0 %v203
        %232 = vmatprep.subr.mxu0 %v207
        %233 = vmatpush1.msra.mxu0 %v206
        %234 = vmatprep.subr.mxu0 0.0
        %235 = vmatpush1.msra.mxu0 0.0
        %236 = vmatprep.subr.mxu0 0.0
        %237 = vmatpush1.msra.mxu0 0.0
        %238 = vmatprep.subr.mxu0 0.0
        %239 = vmatpush1.msra.mxu0 0.0
        %240 = vmatprep.subr.mxu0 0.0
        %241 = vmatpush1.msra.mxu0 0.0
        %242 = vmatprep.subr.mxu0 0.0
        %243 = vmatpush1.msra.mxu0 0.0
        %244 = vmatprep.subr.mxu0 0.0
        %245 = vmatpush1.msra.mxu0 0.0
        %246 = vmatprep.subr.mxu0 0.0
        %247 = vmatpush1.msra.mxu0 0.0
        %248 = vmatprep.subr.mxu0 0.0
        %249 = vmatpush1.msra.mxu0 0.0
        %250 = vmatprep.subr.mxu0 0.0
        %251 = vmatpush1.msra.mxu0 0.0
        %252 = vmatprep.subr.mxu0 0.0
        %253 = vmatpush1.msra.mxu0 0.0
        %254 = vmatprep.subr.mxu0 0.0
        %255 = vmatpush1.msra.mxu0 0.0
        %256 = vmatprep.subr.mxu0 0.0
        %257 = vmatpush1.msra.mxu0 0.0
        %258 = vmatprep.subr.mxu0 0.0
        %259 = vmatpush1.msra.mxu0 0.0
        %260 = vmatprep.subr.mxu0 0.0
        %261 = vmatpush1.msra.mxu0 0.0
        %262 = vmatprep.subr.mxu0 0.0
        %263 = vmatpush1.msra.mxu0 0.0
        %264 = vmatprep.subr.mxu0 0.0
        %265 = vmatpush1.msra.mxu0 0.0
        %266 = vmatprep.subr.mxu0 0.0
        %267 = vmatpush1.msra.mxu0 0.0
        %268 = vmatprep.subr.mxu0 0.0
        %269 = vmatpush1.msra.mxu0 0.0
        %270 = vmatprep.subr.mxu0 0.0
        %271 = vmatpush1.msra.mxu0 0.0
        %272 = vmatprep.subr.mxu0 0.0
        %273 = vmatpush1.msra.mxu0 0.0
        %274 = vmatprep.subr.mxu0 0.0
        %275 = vmatpush1.msra.mxu0 0.0
        %276 = vmatprep.subr.mxu0 0.0
        %277 = vmatpush1.msra.mxu0 0.0
        %278 = vmatprep.subr.mxu0 0.0
        %279 = vmatpush1.msra.mxu0 0.0
        %280 = vmatprep.subr.mxu0 0.0
        %281 = vmatpush1.msra.mxu0 0.0
        %282 = vmatprep.subr.mxu0 0.0
        %283 = vmatpush1.msra.mxu0 0.0
        %284 = vmatprep.subr.mxu0 0.0
        %285 = vmatpush1.msra.mxu0 0.0
        %286 = vmatprep.subr.mxu0 0.0
        %287 = vmatpush1.msra.mxu0 0.0
        %288 = vmatprep.subr.mxu0 0.0
        %289 = vmatpush1.msra.mxu0 0.0
        %290 = vmatprep.subr.mxu0 0.0
        %291 = vmatpush1.msra.mxu0 0.0
        %292 = vmatprep.subr.mxu0 0.0
        %293 = vmatpush1.msra.mxu0 0.0
        %294 = vmatprep.mubr.f32.mxu0 0.0
        %295 = vmatmul.mubr.f32.gmra.mrb[0].mxu0 %v228
        %v296 = vpop.f32.mrb[0].mxu0
        %v297 = vadd.f32 %v214, %v296
        %v298 = vpop.f32.mrb[0].mxu0
        %v299 = vadd.f32 %v218, %v298
        %300 = vdwg.mxu0
        %301 = vmatprep.subr.mxu0 0.0
        %302 = vmatpush1.msra.mxu0 %v205
        %303 = vmatprep.subr.mxu0 0.0
        %304 = vmatpush1.msra.mxu0 %v208
        %305 = vmatprep.subr.mxu0 0.0
        %306 = vmatpush1.msra.mxu0 0.0
        %307 = vmatprep.subr.mxu0 0.0
        %308 = vmatpush1.msra.mxu0 0.0
        %309 = vmatprep.subr.mxu0 0.0
        %310 = vmatpush1.msra.mxu0 0.0
        %311 = vmatprep.subr.mxu0 0.0
        %312 = vmatpush1.msra.mxu0 0.0
        %313 = vmatprep.subr.mxu0 0.0
        %314 = vmatpush1.msra.mxu0 0.0
        %315 = vmatprep.subr.mxu0 0.0
        %316 = vmatpush1.msra.mxu0 0.0
        %317 = vmatprep.subr.mxu0 0.0
        %318 = vmatpush1.msra.mxu0 0.0
        %319 = vmatprep.subr.mxu0 0.0
        %320 = vmatpush1.msra.mxu0 0.0
        %321 = vmatprep.subr.mxu0 0.0
        %322 = vmatpush1.msra.mxu0 0.0
        %323 = vmatprep.subr.mxu0 0.0
        %324 = vmatpush1.msra.mxu0 0.0
        %325 = vmatprep.subr.mxu0 0.0
        %326 = vmatpush1.msra.mxu0 0.0
        %327 = vmatprep.subr.mxu0 0.0
        %328 = vmatpush1.msra.mxu0 0.0
        %329 = vmatprep.subr.mxu0 0.0
        %330 = vmatpush1.msra.mxu0 0.0
        %331 = vmatprep.subr.mxu0 0.0
        %332 = vmatpush1.msra.mxu0 0.0
        %333 = vmatprep.subr.mxu0 0.0
        %334 = vmatpush1.msra.mxu0 0.0
        %335 = vmatprep.subr.mxu0 0.0
        %336 = vmatpush1.msra.mxu0 0.0
        %337 = vmatprep.subr.mxu0 0.0
        %338 = vmatpush1.msra.mxu0 0.0
        %339 = vmatprep.subr.mxu0 0.0
        %340 = vmatpush1.msra.mxu0 0.0
        %341 = vmatprep.subr.mxu0 0.0
        %342 = vmatpush1.msra.mxu0 0.0
        %343 = vmatprep.subr.mxu0 0.0
        %344 = vmatpush1.msra.mxu0 0.0
        %345 = vmatprep.subr.mxu0 0.0
        %346 = vmatpush1.msra.mxu0 0.0
        %347 = vmatprep.subr.mxu0 0.0
        %348 = vmatpush1.msra.mxu0 0.0
        %349 = vmatprep.subr.mxu0 0.0
        %350 = vmatpush1.msra.mxu0 0.0
        %351 = vmatprep.subr.mxu0 0.0
        %352 = vmatpush1.msra.mxu0 0.0
        %353 = vmatprep.subr.mxu0 0.0
        %354 = vmatpush1.msra.mxu0 0.0
        %355 = vmatprep.subr.mxu0 0.0
        %356 = vmatpush1.msra.mxu0 0.0
        %357 = vmatprep.subr.mxu0 0.0
        %358 = vmatpush1.msra.mxu0 0.0
        %359 = vmatprep.subr.mxu0 0.0
        %360 = vmatpush1.msra.mxu0 0.0
        %361 = vmatprep.subr.mxu0 0.0
        %362 = vmatpush1.msra.mxu0 0.0
        %363 = vmatprep.subr.mxu0 0.0
        %364 = vmatpush1.msra.mxu0 0.0
        %365 = vmatprep.mubr.f32.mxu0 0.0
        %366 = vmatmul.mubr.f32.gmra.mrb[0].mxu0 %v228
        %v367 = vpop.f32.mrb[0].mxu0
        %v368 = vadd.f32 %v222, %v367
        %v369 = vpop.f32.mrb[0].mxu0
        %370 = vdwg.mxu0
        %v371 = vpack.c.bf16 %v297, %v297
        %v372 = vpack.c.bf16 %v299, %v299
        %373 = vmatprep.subr.bf16.mxu0 0
        %374 = vmatpush1.bf16.xpose.msra.mxu0 %v372
        %375 = vmatprep.subr.bf16.mxu0 0
        %376 = vmatpush1.bf16.xpose.msra.mxu0 0
        %377 = vmatprep.subr.bf16.mxu0 0
        %378 = vmatpush1.bf16.xpose.msra.mxu0 0
        %379 = vmatprep.subr.bf16.mxu0 0
        %380 = vmatpush1.bf16.xpose.msra.mxu0 0
        %381 = vmatprep.subr.bf16.mxu0 0
        %382 = vmatpush1.bf16.xpose.msra.mxu0 0
        %383 = vmatprep.subr.bf16.mxu0 0
        %384 = vmatpush1.bf16.xpose.msra.mxu0 0
        %385 = vmatprep.subr.bf16.mxu0 0
        %386 = vmatpush1.bf16.xpose.msra.mxu0 0
        %387 = vmatprep.subr.bf16.mxu0 0
        %388 = vmatpush1.bf16.xpose.msra.mxu0 0
        %389 = vmatprep.subr.bf16.mxu0 0
        %390 = vmatpush1.bf16.xpose.msra.mxu0 0
        %391 = vmatprep.subr.bf16.mxu0 0
        %392 = vmatpush1.bf16.xpose.msra.mxu0 0
        %393 = vmatprep.subr.bf16.mxu0 0
        %394 = vmatpush1.bf16.xpose.msra.mxu0 0
        %395 = vmatprep.subr.bf16.mxu0 0
        %396 = vmatpush1.bf16.xpose.msra.mxu0 0
        %397 = vmatprep.subr.bf16.mxu0 0
        %398 = vmatpush1.bf16.xpose.msra.mxu0 0
        %399 = vmatprep.subr.bf16.mxu0 0
        %400 = vmatpush1.bf16.xpose.msra.mxu0 0
        %401 = vmatprep.subr.bf16.mxu0 0
        %402 = vmatpush1.bf16.xpose.msra.mxu0 0
        %403 = vmatprep.subr.bf16.mxu0 0
        %404 = vmatpush1.bf16.xpose.msra.mxu0 0
        %405 = vmatprep.mubr.bf16.mxu0 0
        %406 = vmatmul.mubr.bf16.gmra.mrb[0].mxu0 %v371
        %v407 = vpop.f32.mrb[0].mxu0
        %v408 = vadd.f32 0.0, %v407
        %v409 = vpop.f32.mrb[0].mxu0
        %v410 = vpop.f32.mrb[0].mxu0
        %v411 = vpop.f32.mrb[0].mxu0
        %412 = vdwg.mxu0
        %vm413 = vcmask 64512
        %v414 = vsel %vm413, %v408, -inf
        %415 = vmax.xlane.f32.xlu0 %v414
        %v416 = vpop.xlane.xlu0 %415
        %v417 = vsub.f32 %v408, %v416
        %v418 = vmul.f32 %v417, 1.442695
        %v419 = vpow.pop %v418
        %v420 = vsel %vm413, %v419, 0.0
        %421 = vadd.xlane.f32.xlu0 %v420
        %v422 = vpop.xlane.xlu0 %421
        %v423 = vpack.c.bf16 %v419, %v419
        %v424 = vpack.c.bf16 %v368, %v368
        %v426 = vsel %vm413, %v423, 0
        %vm428 = vcmask 1043456
        %v430 = vsel %vm428, %v424, 0
        %432 = vmatprep.subr.bf16.mxu0 0
        %433 = vmatpush1.bf16.msra.mxu0 %v430
        %434 = vmatprep.subr.bf16.mxu0 0
        %435 = vmatpush1.bf16.msra.mxu0 0
        %436 = vmatprep.subr.bf16.mxu0 0
        %437 = vmatpush1.bf16.msra.mxu0 0
        %438 = vmatprep.subr.bf16.mxu0 0
        %439 = vmatpush1.bf16.msra.mxu0 0
        %440 = vmatprep.subr.bf16.mxu0 0
        %441 = vmatpush1.bf16.msra.mxu0 0
        %442 = vmatprep.subr.bf16.mxu0 0
        %443 = vmatpush1.bf16.msra.mxu0 0
        %444 = vmatprep.subr.bf16.mxu0 0
        %445 = vmatpush1.bf16.msra.mxu0 0
        %446 = vmatprep.subr.bf16.mxu0 0
        %447 = vmatpush1.bf16.msra.mxu0 0
        %448 = vmatprep.subr.bf16.mxu0 0
        %449 = vmatpush1.bf16.msra.mxu0 0
        %450 = vmatprep.subr.bf16.mxu0 0
        %451 = vmatpush1.bf16.msra.mxu0 0
        %452 = vmatprep.subr.bf16.mxu0 0
        %453 = vmatpush1.bf16.msra.mxu0 0
        %454 = vmatprep.subr.bf16.mxu0 0
        %455 = vmatpush1.bf16.msra.mxu0 0
        %456 = vmatprep.subr.bf16.mxu0 0
        %457 = vmatpush1.bf16.msra.mxu0 0
        %458 = vmatprep.subr.bf16.mxu0 0
        %459 = vmatpush1.bf16.msra.mxu0 0
        %460 = vmatprep.subr.bf16.mxu0 0
        %461 = vmatpush1.bf16.msra.mxu0 0
        %462 = vmatprep.subr.bf16.mxu0 0
        %463 = vmatpush1.bf16.msra.mxu0 0
        %464 = vmatprep.mubr.bf16.mxu0 0
        %465 = vmatmul.mubr.bf16.gmra.mrb[0].mxu0 %v426
        %v466 = vpop.f32.mrb[0].mxu0
        %v467 = vadd.f32 0.0, %v466
        %v468 = vpop.f32.mrb[0].mxu0
        %v469 = vpop.f32.mrb[0].mxu0
        %v470 = vpop.f32.mrb[0].mxu0
        %471 = vdwg.mxu0
        %v472 = vrcp.pop %v422
        %v473 = vmul.f32 1.0, %v472
        %v474 = vmul.f32 %v467, %v473
        %475 = vst [vmem:[%s200] sm:$0xff] %v474
        %s476 = sand.u32 %s97, 1
        %s477 = scalar_lea.sflag [#allocation4], %s476
        %s478 = sand.u32 %s97, 1
        %s479 = smul.addr %s478, 8
        %s480 = scalar_lea.vmem [#allocation7], %s479
        // Predicated region
        $region41: #{tpu_custom_call.1} parent=31 // pred_check
          %p481 = pneg %p107
        $region42: #{tpu_custom_call.1} parent=31 // pred_check_branch
          %483 = sbr.rel (%p481) target = $region44
        $region43: #{tpu_custom_call.1} parent=31 // pred_region
          %s485 = ssub.s32 128, 128
          %486 = vsyncadd %s477, %s485
          %s487 = smul.addr %s21, 128
          %s488 = scalar_lea.hbm %s3, %s487
          %s490 = sshll.u32 %s480, 4
          %s491 = int_to_ptr.vmem [resolvable:$true] %s490
          %493 = dma.vmem_to_hbm [thread:$0]  %s491, 128, %s488, %s477
        $region44: #{tpu_custom_call.1} parent=31 // pred_fallthru
          _
      $region32: #{tpu_custom_call.1} parent=5 // pred_fallthru
        _
      %p494 = scmp.le.s32.totalorder 2, %s16
      // Predicated region
      $region45: #{tpu_custom_call.1} parent=5 // pred_check
        %p495 = pneg %p494
      $region46: #{tpu_custom_call.1} parent=5 // pred_check_branch
        %497 = sbr.rel (%p495) target = $region48
      $region47: #{tpu_custom_call.1} parent=5 // pred_region
        %s498 = ssub.s32 %s16, 2
        // Predicated region
        $region49: #{tpu_custom_call.1} parent=47 // pred_check
          %p499 = pneg %p113
        $region50: #{tpu_custom_call.1} parent=47 // pred_check_branch
          %501 = sbr.rel (%p499) target = $region52
        $region51: #{tpu_custom_call.1} parent=47 // pred_region
          %s502 = sand.u32 %s98, 1
          %s503 = scalar_lea.sflag [#allocation4], %s502
          %s504 = sand.u32 %s98, 1
          %s505 = smul.addr %s504, 8
          %s506 = scalar_lea.vmem [#allocation7], %s505
          %507 = dma.done %s503, 128
        $region52: #{tpu_custom_call.1} parent=47 // pred_fallthru
          _
      $region48: #{tpu_custom_call.1} parent=5 // pred_fallthru
        _
    $region6: #{tpu_custom_call.1} parent=1 // loop_footer
      %s20 = sadd.s32 1, %s16
    $region7: #{tpu_custom_call.1} parent=1 // loop_footer_branch
      %15 = sbr.rel target = $region3
    $region8: #{tpu_custom_call.1} parent=1 // loop_exit
      _
    %508 = vsyncpa [#allocation3], 1
    %s509 = scalar_lea.sflag [#allocation3], 1
    %510 = vsyncpa %s509, 1
    %511 = vsyncpa [#allocation6], 1
    %512 = vsyncpa [#allocation4], 1
    %s513 = scalar_lea.sflag [#allocation4], 1
    %514 = vsyncpa %s513, 1

</llo_original>
